<compile_context>
chip_gen: v7x
topology: tpu7x:2x2x1
jax: 0.10.0
libtpu: 0.0.40
codegen_flags: <defaults>
</compile_context>

<pallas_src>
import functools
import math

import jax
import jax.numpy as jnp
from jax.experimental import pallas as pl
from jax.experimental.pallas import tpu as pltpu


def _svam_kernel(ex_ref, ew_ref, thr_ref, fin_ref, tgt_ref, out_ref,
                 *, t, scale, block_c):
    c_idx = pl.program_id(0)

    # cos = ex @ ew.T : contract the last dim of both bf16 operands (transpose-free
    # NT dot), f32 accumulation on the MXU.  Output tile is lane-dense (TC % 128 == 0).
    cos = jax.lax.dot_general(
        ex_ref[...], ew_ref[...],
        dimension_numbers=(((1,), (1,)), ((), ())),
        preferred_element_type=jnp.float32)                    # (TB, TC) f32

    # Hard-example re-weighting with scale folded into both branches:
    #   hard: scale*(t*cos + t - 1) = (scale*t)*cos + scale*(t-1)
    #   easy: scale*cos
    thr = thr_ref[...]                                         # (TB, 1) = gt - m
    out = jnp.where(cos > thr,
                    (scale * t) * cos + scale * (t - 1.0),
                    scale * cos)

    # Scatter the pre-scaled finalScore into the target column.  The tile's class
    # offset is folded into a (TB,1) subtract rather than the (TB,TC) iota.
    tgt_local = tgt_ref[...] - c_idx * block_c                 # (TB, 1) int32
    col = jax.lax.broadcasted_iota(jnp.int32, out.shape, 1)
    out = jnp.where(col == tgt_local, fin_ref[...], out)

    out_ref[...] = out.astype(out_ref.dtype)


def svam_linear(x, weight, target, *, t=1.2, m=0.35, scale=30.0,
                block_b=256, block_c=1024, out_dtype=jnp.float32):
    """SVAMLinear forward. x: (B, D) f32, weight: (C, D) f32, target: (B,) int."""
    B, D = x.shape
    C, D2 = weight.shape
    assert D == D2

    target = target.astype(jnp.int32)
    tgt2d = target.reshape(B, 1)

    # Row-normalize once, in f32 (x / ||x||, no epsilon -- matches torch.norm
    # division in the module), cast to bf16 only at the MXU boundary.
    xf = x.astype(jnp.float32)
    wf = weight.astype(jnp.float32)
    ex = (xf * jax.lax.rsqrt(jnp.sum(xf * xf, axis=1, keepdims=True))
          ).astype(jnp.bfloat16)                               # (B, D) bf16
    ew = (wf * jax.lax.rsqrt(jnp.sum(wf * wf, axis=1, keepdims=True))
          ).astype(jnp.bfloat16)                               # (C, D) bf16

    # Per-row ground-truth cosine from the gathered normalized target rows, using
    # the same bf16-rounded operands as the MXU matmul (f32 accumulation).
    ewt = jnp.take(ew, target, axis=0)                         # (B, D) bf16
    gt = jnp.sum(ex.astype(jnp.float32) * ewt.astype(jnp.float32),
                 axis=1, keepdims=True)                        # (B, 1) f32
    thr = gt - m                                               # mask threshold
    fin = jnp.where(gt > m, gt - m, gt) * scale                # pre-scaled finalScore

    TB = min(block_b, B)
    TC = min(block_c, C)
    # C outer / B inner: the W block index is constant over the inner loop, so W
    # is fetched from HBM exactly once; x/thr/fin/target are tiny re-reads.
    grid = (pl.cdiv(C, TC), pl.cdiv(B, TB))

    kernel = functools.partial(_svam_kernel, t=float(t), scale=float(scale),
                               block_c=TC)

    # Double-buffered per-step footprint + headroom, clamped for v7x's 64 MiB VMEM.
    vmem_bytes = 2 * (TC * D * 2 + TB * D * 2 + TB * TC * 4 + 3 * TB * 4) + (4 << 20)
    vmem_limit = int(min(max(vmem_bytes, 16 << 20), 64 << 20))

    cost = pl.CostEstimate(
        flops=2 * B * C * D,
        transcendentals=0,                                     # normalization is in the wrapper
        bytes_accessed=(C * D * 2                              # ew streamed once (bf16)
                        + pl.cdiv(C, TC) * B * D * 2           # ex re-read per C tile (bf16)
                        + B * C * jnp.dtype(out_dtype).itemsize
                        + 3 * B * 4),
    )

    return pl.pallas_call(
        kernel,
        out_shape=jax.ShapeDtypeStruct((B, C), out_dtype),
        grid=grid,
        in_specs=[
            pl.BlockSpec((TB, D), lambda c, b: (b, 0)),   # ex  : normalized x (bf16)
            pl.BlockSpec((TC, D), lambda c, b: (c, 0)),   # ew  : normalized W (bf16), streamed once
            pl.BlockSpec((TB, 1), lambda c, b: (b, 0)),   # thr : gt - m
            pl.BlockSpec((TB, 1), lambda c, b: (b, 0)),   # fin : scaled finalScore
            pl.BlockSpec((TB, 1), lambda c, b: (b, 0)),   # target column (int32)
        ],
        out_specs=pl.BlockSpec((TB, TC), lambda c, b: (b, c)),
        compiler_params=pltpu.CompilerParams(
            dimension_semantics=("parallel", "parallel"),  # no carried state: both axes split fine
            vmem_limit_bytes=vmem_limit,
        ),
        cost_estimate=cost,
    )(ex, ew, thr, fin, tgt2d)


def svam_linear_ref(x, weight, target, *, t=1.2, m=0.35, scale=30.0):
    """Pure-JAX reference at the same (bf16 MXU) precision as the kernel."""
    ex = x * jax.lax.rsqrt(jnp.sum(x * x, axis=1, keepdims=True))
    ew = weight * jax.lax.rsqrt(jnp.sum(weight * weight, axis=1, keepdims=True))
    exb = ex.astype(jnp.bfloat16)
    ewb = ew.astype(jnp.bfloat16)
    cos = jax.lax.dot_general(exb, ewb, (((1,), (1,)), ((), ())),
                              preferred_element_type=jnp.float32)
    gt = jnp.take_along_axis(cos, target[:, None], axis=1)
    mask = cos > gt - m
    out = jnp.where(mask, t * cos + (t - 1.0), cos)
    onehot = jax.nn.one_hot(target, cos.shape[1], dtype=bool)
    final = jnp.where(gt > m, gt - m, gt)
    out = jnp.where(onehot, final, out)
    return out * scale, cos, gt


if __name__ == "__main__":
    B, in_channels, num_class = 16, 128, 1024
    t, m, scale = 1.2, 0.35, 30.0

    key = jax.random.PRNGKey(0)
    kx, kw, kt = jax.random.split(key, 3)

    x = jax.random.normal(kx, (B, in_channels), dtype=jnp.float32)
    # PyTorch reset_parameters: uniform(-stdv, stdv), stdv = 1/sqrt(in_channels)
    stdv = 1.0 / math.sqrt(in_channels)
    weight = jax.random.uniform(
        kw, (num_class, in_channels), minval=-stdv, maxval=stdv, dtype=jnp.float32
    )
    target = jax.random.randint(kt, (B,), 0, num_class, dtype=jnp.int32)

    # Small tiles so the demo exercises the multi-tile (C, B) grid.
    out = svam_linear(x, weight, target, t=t, m=m, scale=scale,
                      block_b=8, block_c=256)
    out = jax.block_until_ready(out)

    ref, cos_ref, gt_ref = svam_linear_ref(x, weight, target, t=t, m=m, scale=scale)
    assert out.shape == (B, num_class)
    # Elements numerically on the cos > gt - m decision boundary may legitimately
    # flip branches under low-precision matmul; exclude that thin band from the
    # strict comparison.
    boundary = jnp.abs(cos_ref - (gt_ref - m)) < 1e-3
    ok = jnp.isclose(out, ref, atol=1e-2, rtol=1e-2) | boundary
    assert bool(jnp.all(ok))

    print("KERNEL_OK")
</pallas_src>

<mosaic_0001>
module attributes {stable_mosaic.version = 11 : i64} {
  func.func @_svam_kernel(%arg0: i32, %arg1: i32, %arg2: memref<8x128xbf16, #tpu.memory_space<vmem>>, %arg3: memref<256x128xbf16, #tpu.memory_space<vmem>>, %arg4: memref<8x1xf32, #tpu.memory_space<vmem>>, %arg5: memref<8x1xf32, #tpu.memory_space<vmem>>, %arg6: memref<8x1xi32, #tpu.memory_space<vmem>>, %arg7: memref<8x256xf32, #tpu.memory_space<vmem>>) attributes {dimension_semantics = [#tpu.dimension_semantics<parallel>, #tpu.dimension_semantics<parallel>], iteration_bounds = array<i64: 4, 2>, scalar_prefetch = 0 : i64, scratch_operands = 0 : i64, tpu.core_type = #tpu.core_type<tc>, window_params = [{transform_indices = @transform_0, window_bounds = array<i64: 8, 128>}, {transform_indices = @transform_1, window_bounds = array<i64: 256, 128>}, {transform_indices = @transform_2, window_bounds = array<i64: 8, 1>}, {transform_indices = @transform_3, window_bounds = array<i64: 8, 1>}, {transform_indices = @transform_4, window_bounds = array<i64: 8, 1>}, {transform_indices = @transform_5, window_bounds = array<i64: 8, 256>}]} {
    %c0 = arith.constant 0 : index
    %c0_0 = arith.constant 0 : index
    %0 = vector.load %arg2[%c0, %c0_0] : memref<8x128xbf16, #tpu.memory_space<vmem>>, vector<8x128xbf16>
    %c0_1 = arith.constant 0 : index
    %c0_2 = arith.constant 0 : index
    %1 = vector.load %arg3[%c0_1, %c0_2] : memref<256x128xbf16, #tpu.memory_space<vmem>>, vector<256x128xbf16>
    %cst = arith.constant dense<0.000000e+00> : vector<8x256xf32>
    %2 = tpu.matmul %0, %1, %cst {dimension_numbers = #tpu.dot_dimension_numbers<[1], [1], [0], [0], [0, 0, 1, 0], [], []>} : vector<8x128xbf16>, vector<256x128xbf16>, vector<8x256xf32> -> vector<8x256xf32>
    %c0_3 = arith.constant 0 : index
    %c0_4 = arith.constant 0 : index
    %3 = vector.load %arg4[%c0_3, %c0_4] : memref<8x1xf32, #tpu.memory_space<vmem>>, vector<8x1xf32>
    %4 = vector.broadcast %3 : vector<8x1xf32> to vector<8x256xf32>
    %5 = arith.cmpf ogt, %2, %4 : vector<8x256xf32>
    %cst_5 = arith.constant 3.600000e+01 : f32
    %6 = vector.broadcast %cst_5 : f32 to vector<8x256xf32>
    %7 = arith.mulf %6, %2 : vector<8x256xf32>
    %cst_6 = arith.constant 6.000000e+00 : f32
    %8 = vector.broadcast %cst_6 : f32 to vector<8x256xf32>
    %9 = arith.addf %7, %8 : vector<8x256xf32>
    %cst_7 = arith.constant 3.000000e+01 : f32
    %10 = vector.broadcast %cst_7 : f32 to vector<8x256xf32>
    %11 = arith.mulf %10, %2 : vector<8x256xf32>
    %12 = arith.select %5, %9, %11 : vector<8x256xi1>, vector<8x256xf32>
    %c0_8 = arith.constant 0 : index
    %c0_9 = arith.constant 0 : index
    %13 = vector.load %arg6[%c0_8, %c0_9] : memref<8x1xi32, #tpu.memory_space<vmem>>, vector<8x1xi32>
    %c256_i32 = arith.constant 256 : i32
    %14 = arith.muli %arg0, %c256_i32 : i32
    %15 = vector.broadcast %14 : i32 to vector<8x1xi32>
    %16 = arith.subi %13, %15 : vector<8x1xi32>
    %17 = tpu.iota {dimensions = array<i32: 1>} : vector<8x256xi32>
    %18 = vector.broadcast %16 : vector<8x1xi32> to vector<8x256xi32>
    %19 = arith.cmpi eq, %17, %18 : vector<8x256xi32>
    %c0_10 = arith.constant 0 : index
    %c0_11 = arith.constant 0 : index
    %20 = vector.load %arg5[%c0_10, %c0_11] : memref<8x1xf32, #tpu.memory_space<vmem>>, vector<8x1xf32>
    %21 = vector.shape_cast %20 : vector<8x1xf32> to vector<8x1xf32>
    %22 = vector.broadcast %21 : vector<8x1xf32> to vector<8x256xf32>
    %23 = arith.select %19, %22, %12 : vector<8x256xi1>, vector<8x256xf32>
    %c0_12 = arith.constant 0 : index
    %c0_13 = arith.constant 0 : index
    %24 = vector.load %arg7[%c0_12, %c0_13] : memref<8x256xf32, #tpu.memory_space<vmem>>, vector<8x256xf32>
    tpu.vector_store %arg7[%c0_12, %c0_13], %23 {strides = array<i32>} : memref<8x256xf32, #tpu.memory_space<vmem>>, vector<8x256xf32>,
    return
  }
  func.func @transform_0(%arg0: i32, %arg1: i32) -> (i32, i32) {
    %c0_i32 = arith.constant 0 : i32
    %c0_i32_0 = arith.constant 0 : i32
    return %arg1, %c0_i32 : i32, i32
  }
  func.func @transform_1(%arg0: i32, %arg1: i32) -> (i32, i32) {
    %c0_i32 = arith.constant 0 : i32
    %c0_i32_0 = arith.constant 0 : i32
    return %arg0, %c0_i32 : i32, i32
  }
  func.func @transform_2(%arg0: i32, %arg1: i32) -> (i32, i32) {
    %c0_i32 = arith.constant 0 : i32
    %c0_i32_0 = arith.constant 0 : i32
    return %arg1, %c0_i32 : i32, i32
  }
  func.func @transform_3(%arg0: i32, %arg1: i32) -> (i32, i32) {
    %c0_i32 = arith.constant 0 : i32
    %c0_i32_0 = arith.constant 0 : i32
    return %arg1, %c0_i32 : i32, i32
  }
  func.func @transform_4(%arg0: i32, %arg1: i32) -> (i32, i32) {
    %c0_i32 = arith.constant 0 : i32
    %c0_i32_0 = arith.constant 0 : i32
    return %arg1, %c0_i32 : i32, i32
  }
  func.func @transform_5(%arg0: i32, %arg1: i32) -> (i32, i32) {
    %c0_i32 = arith.constant 0 : i32
    return %arg1, %arg0 : i32, i32
  }
}

</mosaic_0001>

<llo_original>
// kernel: tpu_custom_call.1
$region0: #{tpu_custom_call.1}
  #allocation0 [shape = 'u32[]', space=smem, size = 0x4, offset = 0x4, fixed_abs, tag = 'smem constant byte address 0x4 - core index']
  #allocation1 [shape = 'u32[144,128]{1,0:T(1,128)}', space=vmem, size = 0x12000, scoped, tag = 'internal scratch']
  %s0 = inlined_call_operand.vmem [shape: bf16[16,128], index: 0, kind: input, shape index: {}]
  %s1 = inlined_call_operand.hbm [shape: bf16[1024,128], index: 1, kind: input, shape index: {}]
  %s2 = inlined_call_operand.vmem [shape: f32[16,1], index: 2, kind: input, shape index: {}]
  %s3 = inlined_call_operand.vmem [shape: f32[16,1], index: 3, kind: input, shape index: {}]
  %s4 = inlined_call_operand.vmem [shape: s32[16,1], index: 4, kind: input, shape index: {}]
  %s5 = inlined_call_operand.hbm [shape: f32[16,1024], index: 5, kind: output, shape index: {}]
  %s6 = sld [smem:[#allocation0]]
  $region57: #{tpu_custom_call.1} parent=0
    _
  %s8 = ssub.s32 1, %s6
  %s9 = scalar_select 0, %s8, %s6
  $region1: #{tpu_custom_call.1} parent=0
    #allocation2 [shape = 'u8[131072]{0}', space=vmem, size = 0x20000, scoped, tag = 'input window, operand 1']
    #allocation3 [shape = 's32[2]{0}', space=sflag, size = 0x8, scoped, tag = 'scoped memory for tpu_custom_call.1']
    #allocation4 [shape = 's32[2]{0}', space=sflag, size = 0x8, scoped, tag = 'scoped memory for tpu_custom_call.1']
    #allocation5 [shape = 'u8[16384]{0}', space=vmem, size = 0x4000, scoped, tag = 'output window, operand 0']
    %10 = vsyncpa [#allocation3], 0
    %s11 = scalar_lea.sflag [#allocation3], 1
    %12 = vsyncpa %s11, 0
    %13 = vsyncpa [#allocation4], 0
    %s14 = scalar_lea.sflag [#allocation4], 1
    %15 = vsyncpa %s14, 0
    loop: start=0, step=1, limit=10
    $region2: #{tpu_custom_call.1} parent=1 // loop_pre_header
      _
    $region3: #{tpu_custom_call.1} parent=1 // loop_header
      %s17 = sphi 0, %s21
      %p18 = scmp.ge.s32.totalorder %s17, 10
      %s24 = sphi 0, %s36
      %s25 = sphi 0, %s32
      %s26 = sphi 0, %s24
      %s27 = sphi 0, %s25
      %s28 = sphi 0, %s26
      %s29 = sphi 0, %s27
      %s39 = sphi 0, %s41
      %s42 = sphi 0, %s39
      %s43 = sphi 0, %s42
      %s59 = sphi 0, %s43
      %s65 = sphi 0, %s67
      %s68 = sphi 0, %s65
      %s69 = sphi 0, %s68
      %s85 = sphi 0, %s69
      %s91 = sphi 0, %s93
      %s94 = sphi 0, %s91
      %s95 = sphi 0, %s94
      %s111 = sphi 0, %s95
      %s117 = sphi 0, %s119
      %s120 = sphi 0, %s117
      %s121 = sphi 0, %s120
      %s137 = sphi 0, %s121
      %s143 = sphi 0, %s145
      %s146 = sphi 0, %s143
      %s147 = sphi 0, %s146
      %s163 = sphi 0, %s147
      %s171 = sphi 0, %s173
      %s174 = sphi 0, %s171
      %s175 = sphi 0, %s174
      %s191 = sphi 0, %s175
    $region4: #{tpu_custom_call.1} parent=1 // loop_header_branch
      %20 = sbr.rel (%p18) target = $region8
    $region5: #{tpu_custom_call.1} parent=1 // loop_body
      %s22 = ssub.s32 %s17, 1
      %s23 = ssub.s32 %s17, 2
      %s30 = sadd.s32 1, %s25
      %p31 = scmp.ge.s32.totalorder %s30, 2
      %s32 = scalar_select %p31, 0, %s30
      %s33 = sadd.s32 1, %s24
      %s34 = scalar_select %p31, %s33, %s24
      %p35 = scmp.ge.s32.totalorder %s34, 4
      %s36 = scalar_select %p35, 0, %s34
      %s37 = ssub.s32 %s25, %s32
      %p38 = scmp.eq.s32.totalorder %s37, 0
      %s40 = sadd.s32 %s39, 1
      %s41 = scalar_select %p38, %s39, %s40
      %p44 = pneg %p38
      %p45 = scmp.eq.s32.totalorder %s17, 7
      %p46 = por %p44, %p45
      %p47 = scmp.ne.s32.totalorder %s39, %s42
      %p48 = scmp.eq.s32.totalorder %s17, 0
      %p49 = por %p47, %p48
      %p50 = scmp.ne.s32.totalorder %s39, %s42
      %p51 = scmp.eq.s32.totalorder %s22, 7
      %p52 = por %p50, %p51
      %p53 = scmp.ne.s32.totalorder %s42, %s43
      %p54 = scmp.eq.s32.totalorder %s22, 0
      %p55 = por %p53, %p54
      %p56 = scmp.ne.s32.totalorder %s42, %s43
      %p57 = scmp.eq.s32.totalorder %s23, 7
      %p58 = por %p56, %p57
      %p60 = scmp.ne.s32.totalorder %s43, %s59
      %p61 = scmp.eq.s32.totalorder %s23, 0
      %p62 = por %p60, %p61
      %s63 = ssub.s32 %s24, %s36
      %p64 = scmp.eq.s32.totalorder %s63, 0
      %s66 = sadd.s32 %s65, 1
      %s67 = scalar_select %p64, %s65, %s66
      %p70 = pneg %p64
      %p71 = scmp.eq.s32.totalorder %s17, 7
      %p72 = por %p70, %p71
      %p73 = scmp.ne.s32.totalorder %s65, %s68
      %p74 = scmp.eq.s32.totalorder %s17, 0
      %p75 = por %p73, %p74
      %p76 = scmp.ne.s32.totalorder %s65, %s68
      %p77 = scmp.eq.s32.totalorder %s22, 7
      %p78 = por %p76, %p77
      %p79 = scmp.ne.s32.totalorder %s68, %s69
      %p80 = scmp.eq.s32.totalorder %s22, 0
      %p81 = por %p79, %p80
      %p82 = scmp.ne.s32.totalorder %s68, %s69
      %p83 = scmp.eq.s32.totalorder %s23, 7
      %p84 = por %p82, %p83
      %p86 = scmp.ne.s32.totalorder %s69, %s85
      %p87 = scmp.eq.s32.totalorder %s23, 0
      %p88 = por %p86, %p87
      %s89 = ssub.s32 %s25, %s32
      %p90 = scmp.eq.s32.totalorder %s89, 0
      %s92 = sadd.s32 %s91, 1
      %s93 = scalar_select %p90, %s91, %s92
      %p96 = pneg %p90
      %p97 = scmp.eq.s32.totalorder %s17, 7
      %p98 = por %p96, %p97
      %p99 = scmp.ne.s32.totalorder %s91, %s94
      %p100 = scmp.eq.s32.totalorder %s17, 0
      %p101 = por %p99, %p100
      %p102 = scmp.ne.s32.totalorder %s91, %s94
      %p103 = scmp.eq.s32.totalorder %s22, 7
      %p104 = por %p102, %p103
      %p105 = scmp.ne.s32.totalorder %s94, %s95
      %p106 = scmp.eq.s32.totalorder %s22, 0
      %p107 = por %p105, %p106
      %p108 = scmp.ne.s32.totalorder %s94, %s95
      %p109 = scmp.eq.s32.totalorder %s23, 7
      %p110 = por %p108, %p109
      %p112 = scmp.ne.s32.totalorder %s95, %s111
      %p113 = scmp.eq.s32.totalorder %s23, 0
      %p114 = por %p112, %p113
      %s115 = ssub.s32 %s25, %s32
      %p116 = scmp.eq.s32.totalorder %s115, 0
      %s118 = sadd.s32 %s117, 1
      %s119 = scalar_select %p116, %s117, %s118
      %p122 = pneg %p116
      %p123 = scmp.eq.s32.totalorder %s17, 7
      %p124 = por %p122, %p123
      %p125 = scmp.ne.s32.totalorder %s117, %s120
      %p126 = scmp.eq.s32.totalorder %s17, 0
      %p127 = por %p125, %p126
      %p128 = scmp.ne.s32.totalorder %s117, %s120
      %p129 = scmp.eq.s32.totalorder %s22, 7
      %p130 = por %p128, %p129
      %p131 = scmp.ne.s32.totalorder %s120, %s121
      %p132 = scmp.eq.s32.totalorder %s22, 0
      %p133 = por %p131, %p132
      %p134 = scmp.ne.s32.totalorder %s120, %s121
      %p135 = scmp.eq.s32.totalorder %s23, 7
      %p136 = por %p134, %p135
      %p138 = scmp.ne.s32.totalorder %s121, %s137
      %p139 = scmp.eq.s32.totalorder %s23, 0
      %p140 = por %p138, %p139
      %s141 = ssub.s32 %s25, %s32
      %p142 = scmp.eq.s32.totalorder %s141, 0
      %s144 = sadd.s32 %s143, 1
      %s145 = scalar_select %p142, %s143, %s144
      %p148 = pneg %p142
      %p149 = scmp.eq.s32.totalorder %s17, 7
      %p150 = por %p148, %p149
      %p151 = scmp.ne.s32.totalorder %s143, %s146
      %p152 = scmp.eq.s32.totalorder %s17, 0
      %p153 = por %p151, %p152
      %p154 = scmp.ne.s32.totalorder %s143, %s146
      %p155 = scmp.eq.s32.totalorder %s22, 7
      %p156 = por %p154, %p155
      %p157 = scmp.ne.s32.totalorder %s146, %s147
      %p158 = scmp.eq.s32.totalorder %s22, 0
      %p159 = por %p157, %p158
      %p160 = scmp.ne.s32.totalorder %s146, %s147
      %p161 = scmp.eq.s32.totalorder %s23, 7
      %p162 = por %p160, %p161
      %p164 = scmp.ne.s32.totalorder %s147, %s163
      %p165 = scmp.eq.s32.totalorder %s23, 0
      %p166 = por %p164, %p165
      %s167 = ssub.s32 %s25, %s32
      %s168 = ssub.s32 %s24, %s36
      %s169 = sor.u32 %s167, %s168
      %p170 = scmp.eq.s32.totalorder %s169, 0
      %s172 = sadd.s32 %s171, 1
      %s173 = scalar_select %p170, %s171, %s172
      %p176 = pneg %p170
      %p177 = scmp.eq.s32.totalorder %s17, 7
      %p178 = por %p176, %p177
      %p179 = scmp.ne.s32.totalorder %s171, %s174
      %p180 = scmp.eq.s32.totalorder %s17, 0
      %p181 = por %p179, %p180
      %p182 = scmp.ne.s32.totalorder %s171, %s174
      %p183 = scmp.eq.s32.totalorder %s22, 7
      %p184 = por %p182, %p183
      %p185 = scmp.ne.s32.totalorder %s174, %s175
      %p186 = scmp.eq.s32.totalorder %s22, 0
      %p187 = por %p185, %p186
      %p188 = scmp.ne.s32.totalorder %s174, %s175
      %p189 = scmp.eq.s32.totalorder %s23, 7
      %p190 = por %p188, %p189
      %p192 = scmp.ne.s32.totalorder %s175, %s191
      %p193 = scmp.eq.s32.totalorder %s23, 0
      %p194 = por %p192, %p193
      %p195 = scmp.le.s32.totalorder 1, %s17
      %p196 = scmp.lt.s32.totalorder %s17, 9
      %p197 = pnand %p195, %p196
      %p198 = pneg %p197
      // Predicated region
      $region9: #{tpu_custom_call.1} parent=5 // pred_check
        _
      $region10: #{tpu_custom_call.1} parent=5 // pred_check_branch
        %200 = sbr.rel (%p197) target = $region12
      $region11: #{tpu_custom_call.1} parent=5 // pred_region
        %s201 = ssub.s32 %s17, 1
      $region12: #{tpu_custom_call.1} parent=5 // pred_fallthru
        _
      %p202 = scmp.lt.s32.totalorder %s17, 8
      // Predicated region
      $region13: #{tpu_custom_call.1} parent=5 // pred_check
        %p203 = pneg %p202
      $region14: #{tpu_custom_call.1} parent=5 // pred_check_branch
        %205 = sbr.rel (%p203) target = $region16
      $region15: #{tpu_custom_call.1} parent=5 // pred_region
        // Predicated region
        $region17: #{tpu_custom_call.1} parent=15 // pred_check
          %p206 = pneg %p49
        $region18: #{tpu_custom_call.1} parent=15 // pred_check_branch
          %208 = sbr.rel (%p206) target = $region20
        $region19: #{tpu_custom_call.1} parent=15 // pred_region
          %p209 = scmp.lt.s32.totalorder %s25, 1
          %s210 = scalar_select %p209, %s25, 1
          %s211 = smul.addr %s210, 4
          %s212 = scalar_lea.vmem %s0, %s211
        $region20: #{tpu_custom_call.1} parent=15 // pred_fallthru
          _
        // Predicated region
        $region21: #{tpu_custom_call.1} parent=15 // pred_check
          %p213 = pneg %p75
        $region22: #{tpu_custom_call.1} parent=15 // pred_check_branch
          %215 = sbr.rel (%p213) target = $region24
        $region23: #{tpu_custom_call.1} parent=15 // pred_region
          %s216 = sand.u32 %s65, 1
          %s217 = scalar_lea.sflag [#allocation3], %s216
          %s218 = sand.u32 %s65, 1
          %s219 = smul.addr %s218, 128
          %s220 = scalar_lea.vmem [#allocation2], %s219
          %s221 = smul.u32 32, %s24
          %s223 = ssub.s32 2048, 2048
          %224 = vsyncadd %s217, %s223
          %s225 = smul.addr %s221, 64
          %s226 = scalar_lea.hbm %s1, %s225
          %s227 = sshll.u32 %s220, 4
          %s228 = int_to_ptr.vmem [resolvable:$true] %s227
          %233 = dma.hbm_to_vmem [thread:$0]  %s226, 2048, %s228, %s217, 64, 64, 4
        $region24: #{tpu_custom_call.1} parent=15 // pred_fallthru
          _
        // Predicated region
        $region25: #{tpu_custom_call.1} parent=15 // pred_check
          %p234 = pneg %p101
        $region26: #{tpu_custom_call.1} parent=15 // pred_check_branch
          %236 = sbr.rel (%p234) target = $region28
        $region27: #{tpu_custom_call.1} parent=15 // pred_region
          %p237 = scmp.lt.s32.totalorder %s25, 1
          %s238 = scalar_select %p237, %s25, 1
          %s239 = smul.addr %s238, 8
          %s240 = scalar_lea.vmem %s2, %s239
        $region28: #{tpu_custom_call.1} parent=15 // pred_fallthru
          _
        // Predicated region
        $region29: #{tpu_custom_call.1} parent=15 // pred_check
          %p241 = pneg %p127
        $region30: #{tpu_custom_call.1} parent=15 // pred_check_branch
          %243 = sbr.rel (%p241) target = $region32
        $region31: #{tpu_custom_call.1} parent=15 // pred_region
          %p244 = scmp.lt.s32.totalorder %s25, 1
          %s245 = scalar_select %p244, %s25, 1
          %s246 = smul.addr %s245, 8
          %s247 = scalar_lea.vmem %s3, %s246
        $region32: #{tpu_custom_call.1} parent=15 // pred_fallthru
          _
        // Predicated region
        $region33: #{tpu_custom_call.1} parent=15 // pred_check
          %p248 = pneg %p153
        $region34: #{tpu_custom_call.1} parent=15 // pred_check_branch
          %250 = sbr.rel (%p248) target = $region36
        $region35: #{tpu_custom_call.1} parent=15 // pred_region
          %p251 = scmp.lt.s32.totalorder %s25, 1
          %s252 = scalar_select %p251, %s25, 1
          %s253 = smul.addr %s252, 8
          %s254 = scalar_lea.vmem %s4, %s253
        $region36: #{tpu_custom_call.1} parent=15 // pred_fallthru
          _
      $region16: #{tpu_custom_call.1} parent=5 // pred_fallthru
        _
      %p255 = scmp.le.s32.totalorder 1, %s17
      %p256 = scmp.lt.s32.totalorder %s17, 9
      %p257 = pnand %p255, %p256
      %p258 = pneg %p257
      // Predicated region
      $region37: #{tpu_custom_call.1} parent=5 // pred_check
        _
      $region38: #{tpu_custom_call.1} parent=5 // pred_check_branch
        %260 = sbr.rel (%p257) target = $region40
      $region39: #{tpu_custom_call.1} parent=5 // pred_region
        %s261 = ssub.s32 %s17, 1
        %s262 = sand.u32 %s68, 1
        %s263 = scalar_lea.sflag [#allocation3], %s262
        %s264 = sand.u32 %s68, 1
        %s265 = smul.addr %s264, 128
        %s266 = scalar_lea.vmem [#allocation2], %s265
        // Predicated region
        $region41: #{tpu_custom_call.1} parent=39 // pred_check
          %p267 = pneg %p81
        $region42: #{tpu_custom_call.1} parent=39 // pred_check_branch
          %269 = sbr.rel (%p267) target = $region44
        $region43: #{tpu_custom_call.1} parent=39 // pred_region
          %270 = dma.done %s263, 2048
        $region44: #{tpu_custom_call.1} parent=39 // pred_fallthru
          _
        %p271 = scmp.lt.s32.totalorder %s27, 1
        %s272 = scalar_select %p271, %s27, 1
        %s273 = smul.addr %s272, 4
        %s274 = scalar_lea.vmem %s0, %s273
        %p275 = pneg %p55
        %p276 = pneg %p52
        %s277 = sand.u32 %s68, 1
        %s278 = scalar_lea.sflag [#allocation3], %s277
        %s279 = sand.u32 %s68, 1
        %s280 = smul.addr %s279, 128
        %s281 = scalar_lea.vmem [#allocation2], %s280
        %p282 = pneg %p81
        %p283 = pneg %p78
        %p284 = scmp.lt.s32.totalorder %s27, 1
        %s285 = scalar_select %p284, %s27, 1
        %s286 = smul.addr %s285, 8
        %s287 = scalar_lea.vmem %s2, %s286
        %p288 = pneg %p107
        %p289 = pneg %p104
        %p290 = scmp.lt.s32.totalorder %s27, 1
        %s291 = scalar_select %p290, %s27, 1
        %s292 = smul.addr %s291, 8
        %s293 = scalar_lea.vmem %s3, %s292
        %p294 = pneg %p133
        %p295 = pneg %p130
        %p296 = scmp.lt.s32.totalorder %s27, 1
        %s297 = scalar_select %p296, %s27, 1
        %s298 = smul.addr %s297, 8
        %s299 = scalar_lea.vmem %s4, %s298
        %p300 = pneg %p159
        %p301 = pneg %p156
        %p302 = pneg %p187
        %p303 = pneg %p184
        %s304 = sand.u32 %s174, 1
        %s305 = scalar_lea.sflag [#allocation4], %s304
        %s306 = sand.u32 %s174, 1
        %s307 = smul.addr %s306, 16
        %s308 = scalar_lea.vmem [#allocation5], %s307
        %p309 = scmp.lt.s32.totalorder %s27, 1
        %s310 = scalar_select %p309, %s27, 1
        %s311 = smul.addr %s310, 4
        %s312 = scalar_lea.vmem %s0, %s311
        %s313 = smul.u32 32, %s26
        %p314 = scmp.lt.s32.totalorder %s27, 1
        %s315 = scalar_select %p314, %s27, 1
        %s316 = smul.addr %s315, 8
        %s317 = scalar_lea.vmem %s2, %s316
        %p318 = scmp.lt.s32.totalorder %s27, 1
        %s319 = scalar_select %p318, %s27, 1
        %s320 = smul.addr %s319, 8
        %s321 = scalar_lea.vmem %s3, %s320
        %p322 = scmp.lt.s32.totalorder %s27, 1
        %s323 = scalar_select %p322, %s27, 1
        %s324 = smul.addr %s323, 8
        %s325 = scalar_lea.vmem %s4, %s324
        %s326 = smul.u32 2, %s26
        %v328 = vld [vmem:[%s312] sm:$0xf]
        %v329 = vld [vmem:[%s266] sm:$0xf]
        %v330 = vld [vmem:[%s266 + $0x4] sm:$0xf]
        %v331 = vld [vmem:[%s266 + $0x8] sm:$0xf]
        %v332 = vld [vmem:[%s266 + $0xc] sm:$0xf]
        %v333 = vld [vmem:[%s266 + $0x10] sm:$0xf]
        %v334 = vld [vmem:[%s266 + $0x14] sm:$0xf]
        %v335 = vld [vmem:[%s266 + $0x18] sm:$0xf]
        %v336 = vld [vmem:[%s266 + $0x1c] sm:$0xf]
        %v337 = vld [vmem:[%s266 + $0x20] sm:$0xf]
        %v338 = vld [vmem:[%s266 + $0x24] sm:$0xf]
        %v339 = vld [vmem:[%s266 + $0x28] sm:$0xf]
        %v340 = vld [vmem:[%s266 + $0x2c] sm:$0xf]
        %v341 = vld [vmem:[%s266 + $0x30] sm:$0xf]
        %v342 = vld [vmem:[%s266 + $0x34] sm:$0xf]
        %v343 = vld [vmem:[%s266 + $0x38] sm:$0xf]
        %v344 = vld [vmem:[%s266 + $0x3c] sm:$0xf]
        %v345 = vld [vmem:[%s266 + $0x40] sm:$0xf]
        %v346 = vld [vmem:[%s266 + $0x44] sm:$0xf]
        %v347 = vld [vmem:[%s266 + $0x48] sm:$0xf]
        %v348 = vld [vmem:[%s266 + $0x4c] sm:$0xf]
        %v349 = vld [vmem:[%s266 + $0x50] sm:$0xf]
        %v350 = vld [vmem:[%s266 + $0x54] sm:$0xf]
        %v351 = vld [vmem:[%s266 + $0x58] sm:$0xf]
        %v352 = vld [vmem:[%s266 + $0x5c] sm:$0xf]
        %v353 = vld [vmem:[%s266 + $0x60] sm:$0xf]
        %v354 = vld [vmem:[%s266 + $0x64] sm:$0xf]
        %v355 = vld [vmem:[%s266 + $0x68] sm:$0xf]
        %v356 = vld [vmem:[%s266 + $0x6c] sm:$0xf]
        %v357 = vld [vmem:[%s266 + $0x70] sm:$0xf]
        %v358 = vld [vmem:[%s266 + $0x74] sm:$0xf]
        %v359 = vld [vmem:[%s266 + $0x78] sm:$0xf]
        %v360 = vld [vmem:[%s266 + $0x7c] sm:$0xf]
        %v393 = vunpack.c.l.b16 %v329
        %v394 = vunpack.c.l.b16 %v330
        %v395 = vunpack.c.l.b16 %v331
        %v396 = vunpack.c.l.b16 %v332
        %v397 = vunpack.c.l.b16 %v333
        %v398 = vunpack.c.l.b16 %v334
        %v399 = vunpack.c.l.b16 %v335
        %v400 = vunpack.c.l.b16 %v336
        %v401 = vunpack.c.l.b16 %v337
        %v402 = vunpack.c.l.b16 %v338
        %v403 = vunpack.c.l.b16 %v339
        %v404 = vunpack.c.l.b16 %v340
        %v405 = vunpack.c.l.b16 %v341
        %v406 = vunpack.c.l.b16 %v342
        %v407 = vunpack.c.l.b16 %v343
        %v408 = vunpack.c.l.b16 %v344
        %v409 = vunpack.c.l.b16 %v345
        %v410 = vunpack.c.l.b16 %v346
        %v411 = vunpack.c.l.b16 %v347
        %v412 = vunpack.c.l.b16 %v348
        %v413 = vunpack.c.l.b16 %v349
        %v414 = vunpack.c.l.b16 %v350
        %v415 = vunpack.c.l.b16 %v351
        %v416 = vunpack.c.l.b16 %v352
        %v417 = vunpack.c.l.b16 %v353
        %v418 = vunpack.c.l.b16 %v354
        %v419 = vunpack.c.l.b16 %v355
        %v420 = vunpack.c.l.b16 %v356
        %v421 = vunpack.c.l.b16 %v357
        %v422 = vunpack.c.l.b16 %v358
        %v423 = vunpack.c.l.b16 %v359
        %v424 = vunpack.c.l.b16 %v360
        %v425 = vpack.c.b16 %v394, %v393
        %v426 = vpack.c.b16 %v396, %v395
        %v427 = vpack.c.b16 %v398, %v397
        %v428 = vpack.c.b16 %v400, %v399
        %v429 = vpack.c.b16 %v402, %v401
        %v430 = vpack.c.b16 %v404, %v403
        %v431 = vpack.c.b16 %v406, %v405
        %v432 = vpack.c.b16 %v408, %v407
        %v433 = vpack.c.b16 %v410, %v409
        %v434 = vpack.c.b16 %v412, %v411
        %v435 = vpack.c.b16 %v414, %v413
        %v436 = vpack.c.b16 %v416, %v415
        %v437 = vpack.c.b16 %v418, %v417
        %v438 = vpack.c.b16 %v420, %v419
        %v439 = vpack.c.b16 %v422, %v421
        %v440 = vpack.c.b16 %v424, %v423
        %457 = vmatprep.subr.bf16.mxu0 0
        %458 = vmatpush1.bf16.xpose.msra.mxu0 %v425
        %459 = vmatprep.subr.bf16.mxu0 0
        %460 = vmatpush1.bf16.xpose.msra.mxu0 %v426
        %461 = vmatprep.subr.bf16.mxu0 0
        %462 = vmatpush1.bf16.xpose.msra.mxu0 %v427
        %463 = vmatprep.subr.bf16.mxu0 0
        %464 = vmatpush1.bf16.xpose.msra.mxu0 %v428
        %465 = vmatprep.subr.bf16.mxu0 0
        %466 = vmatpush1.bf16.xpose.msra.mxu0 %v429
        %467 = vmatprep.subr.bf16.mxu0 0
        %468 = vmatpush1.bf16.xpose.msra.mxu0 %v430
        %469 = vmatprep.subr.bf16.mxu0 0
        %470 = vmatpush1.bf16.xpose.msra.mxu0 %v431
        %471 = vmatprep.subr.bf16.mxu0 0
        %472 = vmatpush1.bf16.xpose.msra.mxu0 %v432
        %473 = vmatprep.subr.bf16.mxu0 0
        %474 = vmatpush1.bf16.xpose.msra.mxu0 %v433
        %475 = vmatprep.subr.bf16.mxu0 0
        %476 = vmatpush1.bf16.xpose.msra.mxu0 %v434
        %477 = vmatprep.subr.bf16.mxu0 0
        %478 = vmatpush1.bf16.xpose.msra.mxu0 %v435
        %479 = vmatprep.subr.bf16.mxu0 0
        %480 = vmatpush1.bf16.xpose.msra.mxu0 %v436
        %481 = vmatprep.subr.bf16.mxu0 0
        %482 = vmatpush1.bf16.xpose.msra.mxu0 %v437
        %483 = vmatprep.subr.bf16.mxu0 0
        %484 = vmatpush1.bf16.xpose.msra.mxu0 %v438
        %485 = vmatprep.subr.bf16.mxu0 0
        %486 = vmatpush1.bf16.xpose.msra.mxu0 %v439
        %487 = vmatprep.subr.bf16.mxu0 0
        %488 = vmatpush1.bf16.xpose.msra.mxu0 %v440
        %489 = vmatprep.mubr.bf16.mxu0 0
        %490 = vmatmul.mubr.bf16.gmra.mrb[0].mxu0 %v328
        %v491 = vpop.f32.mrb[0].mxu0
        %v492 = vadd.f32 0.0, %v491
        %v493 = vpop.f32.mrb[0].mxu0
        %v494 = vadd.f32 0.0, %v493
        %v495 = vpop.f32.mrb[0].mxu0
        %v496 = vpop.f32.mrb[0].mxu0
        %497 = vdwg.mxu0
        %v498 = vld [vmem:[%s317] sm:$0xff]
        %500 = vset.pattern.permute.xlu0 0
        %501 = vperm.xlu0 %500, %v498
        %v502 = vpop.permute.xlu0 %501
        %vm504 = vcmp.gt.f32.partialorder %v492, %v502
        %vm505 = vcmp.gt.f32.partialorder %v494, %v502
        %v506 = vmul.f32 %v492, 36.0
        %v507 = vmul.f32 %v494, 36.0
        %v508 = vadd.f32 %v506, 6.0
        %v509 = vadd.f32 %v507, 6.0
        %v510 = vmul.f32 %v492, 30.0
        %v511 = vmul.f32 %v494, 30.0
        %v512 = vsel %vm504, %v508, %v510
        %v513 = vsel %vm505, %v509, %v511
        %v514 = vld [vmem:[%s325] sm:$0xff]
        %s515 = smul.u32 %s26, 256
        %v516 = vstv %s515
        %v517 = vsub.s32 %v514, %v516
        %v518 = vlaneseq
        %v519 = vand.u32 %v518, 127
        %v520 = vadd.s32 %v519, 128
        %521 = vset.pattern.permute.xlu0 0
        %522 = vperm.xlu0 %521, %v517
        %v523 = vpop.permute.xlu0 %522
        %vm524 = vcmp.eq.s32.totalorder %v519, %v523
        %vm525 = vcmp.eq.s32.totalorder %v520, %v523
        %v526 = vld [vmem:[%s321] sm:$0xff]
        %528 = vset.pattern.permute.xlu0 0
        %529 = vperm.xlu0 %528, %v526
        %v530 = vpop.permute.xlu0 %529
        %v532 = vsel %vm524, %v530, %v512
        %v533 = vsel %vm525, %v530, %v513
        %534 = vst [vmem:[%s308] sm:$0xff] %v532
        %535 = vst [vmem:[%s308 + $0x8] sm:$0xff] %v533
        %s536 = sand.u32 %s174, 1
        %s537 = scalar_lea.sflag [#allocation4], %s536
        %s538 = sand.u32 %s174, 1
        %s539 = smul.addr %s538, 16
        %s540 = scalar_lea.vmem [#allocation5], %s539
        // Predicated region
        $region45: #{tpu_custom_call.1} parent=39 // pred_check
          %p541 = pneg %p184
        $region46: #{tpu_custom_call.1} parent=39 // pred_check_branch
          %543 = sbr.rel (%p541) target = $region48
        $region47: #{tpu_custom_call.1} parent=39 // pred_region
          %s544 = smul.u32 2, %s26
          %s546 = ssub.s32 256, 256
          %547 = vsyncadd %s537, %s546
          %s548 = smul.addr %s27, 8
          %s549 = sadd.s32 %s544, %s548
          %s550 = smul.addr %s549, 128
          %s551 = scalar_lea.hbm %s5, %s550
          %s553 = sshll.u32 %s540, 4
          %s554 = int_to_ptr.vmem [resolvable:$true] %s553
          %556 = dma.vmem_to_hbm [thread:$0]  %s554, 256, %s551, %s537
        $region48: #{tpu_custom_call.1} parent=39 // pred_fallthru
          _
      $region40: #{tpu_custom_call.1} parent=5 // pred_fallthru
        _
      %p557 = scmp.le.s32.totalorder 2, %s17
      // Predicated region
      $region49: #{tpu_custom_call.1} parent=5 // pred_check
        %p558 = pneg %p557
      $region50: #{tpu_custom_call.1} parent=5 // pred_check_branch
        %560 = sbr.rel (%p558) target = $region52
      $region51: #{tpu_custom_call.1} parent=5 // pred_region
        %s561 = ssub.s32 %s17, 2
        // Predicated region
        $region53: #{tpu_custom_call.1} parent=51 // pred_check
          %p562 = pneg %p190
        $region54: #{tpu_custom_call.1} parent=51 // pred_check_branch
          %564 = sbr.rel (%p562) target = $region56
        $region55: #{tpu_custom_call.1} parent=51 // pred_region
          %s565 = sand.u32 %s175, 1
          %s566 = scalar_lea.sflag [#allocation4], %s565
          %s567 = sand.u32 %s175, 1
          %s568 = smul.addr %s567, 16
          %s569 = scalar_lea.vmem [#allocation5], %s568
          %570 = dma.done %s566, 256
        $region56: #{tpu_custom_call.1} parent=51 // pred_fallthru
          _
      $region52: #{tpu_custom_call.1} parent=5 // pred_fallthru
        _
    $region6: #{tpu_custom_call.1} parent=1 // loop_footer
      %s21 = sadd.s32 1, %s17
    $region7: #{tpu_custom_call.1} parent=1 // loop_footer_branch
      %16 = sbr.rel target = $region3
    $region8: #{tpu_custom_call.1} parent=1 // loop_exit
      _
    %571 = vsyncpa [#allocation3], 1
    %s572 = scalar_lea.sflag [#allocation3], 1
    %573 = vsyncpa %s572, 1
    %574 = vsyncpa [#allocation4], 1
    %s575 = scalar_lea.sflag [#allocation4], 1
    %576 = vsyncpa %s575, 1

</llo_original>
